<compile_context>
chip_gen: v7x
topology: tpu7x:2x2x1
jax: 0.10.0
libtpu: 0.0.40
codegen_flags: <defaults>
</compile_context>

<pallas_src>
import jax
import jax.numpy as jnp
from jax.experimental import pallas as pl
from jax.experimental.pallas import tpu as pltpu


def _elu(x):
    return jnp.where(x > 0, x, jnp.expm1(x))


def _round_up(v, m):
    return ((v + m - 1) // m) * m


def _auto_tile(feat_dim, target_bytes=1 << 20):
    """Lane-axis tile length giving ~target_bytes of f32 feature payload."""
    t = target_bytes // (4 * max(int(feat_dim), 1))
    t = max(1024, min(t, 1 << 16))
    return _round_up(t, 128)


# ---------------------------------------------------------------------------
# Kernel 1: streaming scatter-sums over nodes and edges ("parallel" grid axis).
# ---------------------------------------------------------------------------
def _reduce_kernel(batch_ref, x_ref, ebatch_ref, ew_ref, e_ref,
                   node_out, edge_out, cnt_out):
    B = node_out.shape[2]
    TN = batch_ref.shape[1]
    TE = ebatch_ref.shape[1]

    # rho^{v->u}: one-hot (graph x node) mask, contracted over the node lane axis.
    g_iota_n = jax.lax.broadcasted_iota(jnp.int32, (B, TN), 0)
    node_mask = (batch_ref[...] == g_iota_n).astype(jnp.float32)          # [B, TN]
    cnt_out[0] = jnp.sum(node_mask, axis=-1, keepdims=True)               # [B, 1]
    node_out[0] = jax.lax.dot_general(
        x_ref[...], node_mask, (((1,), (1,)), ((), ())),
        preferred_element_type=jnp.float32)                               # [Fx, B]

    # rho^{e->u}: weighted one-hot (1/edge_cnt[dst] folded into the mask).
    g_iota_e = jax.lax.broadcasted_iota(jnp.int32, (B, TE), 0)
    edge_mask = (ebatch_ref[...] == g_iota_e).astype(jnp.float32) * ew_ref[...]
    edge_out[0] = jax.lax.dot_general(
        e_ref[...], edge_mask, (((1,), (1,)), ((), ())),
        preferred_element_type=jnp.float32)                               # [Fe, B]


# ---------------------------------------------------------------------------
# Kernel 2: combine partials + phi^u MLP + folded BatchNorm + ELU (grid-less).
# ---------------------------------------------------------------------------
def _make_finalize_kernel(num_hid_layers):
    def kernel(node_part_ref, edge_part_ref, cnt_part_ref, u_ref,
               w_in_u_ref, w_in_x_ref, w_in_e_ref, b_in_ref,
               w_hid_ref, b_hid_ref, w_out_ref,
               bn_scale_ref, bn_shift_ref, out_ref):
        node_sum = jnp.sum(node_part_ref[...], axis=0)        # [Fx, B]
        edge_sum = jnp.sum(edge_part_ref[...], axis=0)        # [Fe, B]
        cnt = jnp.sum(cnt_part_ref[...], axis=0)              # [B, 1]
        inv_n = 1.0 / jnp.maximum(cnt, 1.0)
        node_mean = node_sum.T * inv_n                        # [B, Fx]
        edge_mean = edge_sum.T * inv_n                        # [B, Fe]

        # phi^u: lin_in on concat([u, node_mean, edge_mean]) as split matmuls.
        h = (jnp.dot(u_ref[...], w_in_u_ref[...], preferred_element_type=jnp.float32)
             + jnp.dot(node_mean, w_in_x_ref[...], preferred_element_type=jnp.float32)
             + jnp.dot(edge_mean, w_in_e_ref[...], preferred_element_type=jnp.float32)
             + b_in_ref[...])
        h = _elu(h)
        # TODO(synk): dropout is identity here (inference mode, training=False).
        h_skip = h
        for l in range(num_hid_layers):
            h = _elu(jnp.dot(h, w_hid_ref[l],
                             preferred_element_type=jnp.float32) + b_hid_ref[l])
        if num_hid_layers > 1:
            h = h + h_skip

        z = jnp.dot(h, w_out_ref[...], preferred_element_type=jnp.float32)
        # BatchNorm1d (eval) pre-folded to a single FMA, then ELU.
        out_ref[...] = _elu(z * bn_scale_ref[...] + bn_shift_ref[...])
    return kernel


def global_layer_forward(params, x, edge_index, edge_attr, u, batch,
                         num_hid_layers, bn_eps=1e-5,
                         tile_n=None, tile_e=None):
    B, Fu = u.shape
    N, Fx = x.shape
    E, Fe = edge_attr.shape
    H, Fo = params["w_out"].shape

    batch = batch.astype(jnp.int32)
    dst = edge_index[1].astype(jnp.int32)
    x = x.astype(jnp.float32)
    edge_attr = edge_attr.astype(jnp.float32)
    u = u.astype(jnp.float32)
    # TODO(synk): the u.shape == [0] branch and the normalize=False branch of the
    # PyTorch forward are not implemented (non-empty u, BatchNorm eval assumed).

    B_pad = max(8, _round_up(B, 8))             # full sublane group for mask / MXU M-dim
    u_p = jnp.zeros((B_pad, Fu), jnp.float32).at[:B].set(u)

    # --- cheap O(E) index preprocessing (stays outside the kernel) ---
    edge_cnt = jnp.maximum(
        jax.ops.segment_sum(jnp.ones((E,), jnp.float32), dst, num_segments=N), 1.0)
    edge_batch = batch[dst]          # graph id of each edge's destination node
    edge_w = 1.0 / edge_cnt[dst]     # per-edge 1 / edge_cnt[dst]

    # BatchNorm (eval mode) folded into scale/shift.
    bn_scale = params["bn_gamma"] * jax.lax.rsqrt(params["bn_var"] + bn_eps)
    bn_shift = params["bn_beta"] - params["bn_mean"] * bn_scale

    # --- tiling: one grid axis covering both the node and edge streams ---
    tile_n = tile_n or _auto_tile(Fx)
    tile_e = tile_e or _auto_tile(Fe)
    K = max(pl.cdiv(N, tile_n), pl.cdiv(E, tile_e), 1)
    TN = _round_up(pl.cdiv(N, K), 128)   # lane-aligned nodes per step
    TE = _round_up(pl.cdiv(E, K), 128)   # lane-aligned edges per step
    N_pad, E_pad = K * TN, K * TE

    # Feature-major copies (node/edge index on the lane axis).  The small zero
    # pad (<= K*128 columns) is fused into the transpose copy; there is no
    # separate full-array pad pass any more.
    x_t = jnp.pad(x.T, ((0, 0), (0, N_pad - N)))            # [Fx, N_pad]
    e_t = jnp.pad(edge_attr.T, ((0, 0), (0, E_pad - E)))    # [Fe, E_pad]
    batch_p = jnp.pad(batch, (0, N_pad - N), constant_values=-1).reshape(1, N_pad)
    ebatch_p = jnp.pad(edge_batch, (0, E_pad - E),
                       constant_values=-1).reshape(1, E_pad)
    ew_p = jnp.pad(edge_w, (0, E_pad - E)).reshape(1, E_pad)

    # VMEM budget: double-buffered streaming tiles + margin for mask temporaries.
    def _rows(r):
        return _round_up(max(int(r), 1), 8)
    stream_bytes = 2 * 4 * ((_rows(Fx) + 8) * TN + (_rows(Fe) + 16) * TE)
    vmem_limit = int(min(48 * (1 << 20), max(32 * (1 << 20), 2 * stream_bytes)))

    node_part, edge_part, cnt_part = pl.pallas_call(
        _reduce_kernel,
        out_shape=(jax.ShapeDtypeStruct((K, Fx, B_pad), jnp.float32),
                   jax.ShapeDtypeStruct((K, Fe, B_pad), jnp.float32),
                   jax.ShapeDtypeStruct((K, B_pad, 1), jnp.float32)),
        grid=(K,),
        in_specs=[
            pl.BlockSpec((1, TN), lambda k: (0, k)),       # node graph ids
            pl.BlockSpec((Fx, TN), lambda k: (0, k)),      # x (feature-major)
            pl.BlockSpec((1, TE), lambda k: (0, k)),       # edge graph ids
            pl.BlockSpec((1, TE), lambda k: (0, k)),       # edge weights
            pl.BlockSpec((Fe, TE), lambda k: (0, k)),      # edge_attr (feature-major)
        ],
        out_specs=(pl.BlockSpec((1, Fx, B_pad), lambda k: (k, 0, 0)),
                   pl.BlockSpec((1, Fe, B_pad), lambda k: (k, 0, 0)),
                   pl.BlockSpec((1, B_pad, 1), lambda k: (k, 0, 0))),
        compiler_params=pltpu.CompilerParams(
            dimension_semantics=("parallel",),            # megacore-splittable on v7x
            vmem_limit_bytes=vmem_limit),
    )(batch_p, x_t, ebatch_p, ew_p, e_t)

    if num_hid_layers > 0:
        w_hid, b_hid = params["w_hid"], params["b_hid"]
    else:
        w_hid = jnp.zeros((1, H, H), jnp.float32)
        b_hid = jnp.zeros((1, 1, H), jnp.float32)

    out_p = pl.pallas_call(
        _make_finalize_kernel(num_hid_layers),
        out_shape=jax.ShapeDtypeStruct((B_pad, Fo), jnp.float32),
    )(node_part, edge_part, cnt_part, u_p,
      params["w_in_u"], params["w_in_x"], params["w_in_e"], params["b_in"],
      w_hid, b_hid, params["w_out"], bn_scale, bn_shift)

    return out_p[:B]


def init_params(key, Fx, Fe, Fu, H, Fo, L):
    """Deterministic synthetic init mirroring _init_weights (normalize=True)."""
    def xavier(k, fan_in, fan_out):
        std = (2.0 / (fan_in + fan_out)) ** 0.5
        return std * jax.random.normal(k, (fan_in, fan_out), jnp.float32)

    def default_bias(k, fan_in, dim):
        bound = 1.0 / (fan_in ** 0.5)
        return jax.random.uniform(k, (1, dim), jnp.float32, -bound, bound)

    keys = jax.random.split(key, 2 * L + 3)
    in_dim = Fu + Fx + Fe
    w_in = xavier(keys[0], in_dim, H)          # full xavier then split (u | x | e)
    params = {
        "w_in_u": w_in[:Fu],
        "w_in_x": w_in[Fu:Fu + Fx],
        "w_in_e": w_in[Fu + Fx:],
        "b_in": default_bias(keys[1], in_dim, H),
        "w_hid": jnp.stack([xavier(keys[2 + 2 * l], H, H) for l in range(L)])
                 if L > 0 else jnp.zeros((0, H, H), jnp.float32),
        "b_hid": jnp.stack([default_bias(keys[3 + 2 * l], H, H) for l in range(L)])
                 if L > 0 else jnp.zeros((0, 1, H), jnp.float32),
        "w_out": xavier(keys[2 + 2 * L], H, Fo),   # bias=False since normalize=True
        "bn_gamma": jnp.ones((1, Fo), jnp.float32),
        "bn_beta": jnp.zeros((1, Fo), jnp.float32),
        "bn_mean": jnp.zeros((1, Fo), jnp.float32),
        "bn_var": jnp.ones((1, Fo), jnp.float32),
    }
    return params


def reference_forward(params, x, edge_index, edge_attr, u, batch, L, bn_eps=1e-5):
    """Pure-JAX reference of GlobalLayer.forward (eval mode)."""
    B, N, E = u.shape[0], x.shape[0], edge_attr.shape[0]
    node_cnt = jnp.maximum(
        jax.ops.segment_sum(jnp.ones((N,)), batch, num_segments=B), 1.0)[:, None]
    node_mean = jax.ops.segment_sum(x, batch, num_segments=B) / node_cnt
    e_cnt = jnp.maximum(
        jax.ops.segment_sum(jnp.ones((E,)), edge_index[1], num_segments=N), 1.0)[:, None]
    edge_node_mean = jax.ops.segment_sum(edge_attr, edge_index[1], num_segments=N) / e_cnt
    edge_mean = jax.ops.segment_sum(edge_node_mean, batch, num_segments=B) / node_cnt

    w_in = jnp.concatenate([params["w_in_u"], params["w_in_x"], params["w_in_e"]], axis=0)
    out = jnp.concatenate([u, node_mean, edge_mean], axis=1)
    h = _elu(out @ w_in + params["b_in"])
    h_skip = h
    for l in range(L):
        h = _elu(h @ params["w_hid"][l] + params["b_hid"][l])
    if L > 1:
        h = h + h_skip
    z = h @ params["w_out"]
    z = (z - params["bn_mean"]) / jnp.sqrt(params["bn_var"] + bn_eps) \
        * params["bn_gamma"] + params["bn_beta"]
    return _elu(z)


if __name__ == "__main__":
    # Small example consistent with the module's forward signature.
    B, N, E = 2, 16, 24
    Fx, Fe, Fu = 4, 3, 2          # nfeat_in_dim, efeat_in_dim, gfeat_in_dim
    H, Fo = 32, 8                 # gfeat_hid_dim, gfeat_out_dim
    L = 2                         # num_hid_layers

    key = jax.random.PRNGKey(0)
    k_x, k_e, k_u, k_ei, k_p = jax.random.split(key, 5)

    x = jax.random.normal(k_x, (N, Fx), jnp.float32)
    edge_attr = jax.random.normal(k_e, (E, Fe), jnp.float32)
    u = jax.random.normal(k_u, (B, Fu), jnp.float32)
    edge_index = jax.random.randint(k_ei, (2, E), 0, N, jnp.int32)
    batch = jnp.concatenate([jnp.zeros((N // 2,), jnp.int32),
                             jnp.ones((N - N // 2,), jnp.int32)])

    params = init_params(k_p, Fx, Fe, Fu, H, Fo, L)
    ref = reference_forward(params, x, edge_index, edge_attr, u, batch, L)

    # Default (auto) tiles -> single grid step.
    out1 = jax.block_until_ready(
        global_layer_forward(params, x, edge_index, edge_attr, u, batch, L))
    # Tiny tiles (forces K=2) to exercise the multi-step / partial-sum path.
    out2 = jax.block_until_ready(
        global_layer_forward(params, x, edge_index, edge_attr, u, batch, L,
                             tile_n=8, tile_e=16))

    assert out1.shape == (B, Fo) and out2.shape == (B, Fo)
    assert jnp.allclose(out1, ref, atol=1e-5, rtol=1e-5), (out1, ref)
    assert jnp.allclose(out2, ref, atol=1e-5, rtol=1e-5), (out2, ref)

    print("KERNEL_OK")
</pallas_src>

<mosaic_0001>
module attributes {stable_mosaic.version = 11 : i64} {
  func.func @_reduce_kernel(%arg0: i32, %arg1: memref<1x128xi32, #tpu.memory_space<vmem>>, %arg2: memref<4x128xf32, #tpu.memory_space<vmem>>, %arg3: memref<1x128xi32, #tpu.memory_space<vmem>>, %arg4: memref<1x128xf32, #tpu.memory_space<vmem>>, %arg5: memref<3x128xf32, #tpu.memory_space<vmem>>, %arg6: memref<1x4x8xf32, #tpu.memory_space<vmem>>, %arg7: memref<1x3x8xf32, #tpu.memory_space<vmem>>, %arg8: memref<1x8x1xf32, #tpu.memory_space<vmem>>) attributes {dimension_semantics = [#tpu.dimension_semantics<parallel>], iteration_bounds = array<i64: 1>, scalar_prefetch = 0 : i64, scratch_operands = 0 : i64, tpu.core_type = #tpu.core_type<tc>, window_params = [{transform_indices = @transform_0, window_bounds = array<i64: 1, 128>}, {transform_indices = @transform_1, window_bounds = array<i64: 4, 128>}, {transform_indices = @transform_2, window_bounds = array<i64: 1, 128>}, {transform_indices = @transform_3, window_bounds = array<i64: 1, 128>}, {transform_indices = @transform_4, window_bounds = array<i64: 3, 128>}, {transform_indices = @transform_5, window_bounds = array<i64: 1, 4, 8>}, {transform_indices = @transform_6, window_bounds = array<i64: 1, 3, 8>}, {transform_indices = @transform_7, window_bounds = array<i64: 1, 8, 1>}]} {
    %0 = tpu.iota {dimensions = array<i32: 0>} : vector<8x128xi32>
    %c0 = arith.constant 0 : index
    %c0_0 = arith.constant 0 : index
    %1 = vector.load %arg1[%c0, %c0_0] : memref<1x128xi32, #tpu.memory_space<vmem>>, vector<1x128xi32>
    %2 = vector.broadcast %1 : vector<1x128xi32> to vector<8x128xi32>
    %3 = arith.cmpi eq, %2, %0 : vector<8x128xi32>
    %4 = arith.extui %3 : vector<8x128xi1> to vector<8x128xi32>
    %5 = arith.sitofp %4 : vector<8x128xi32> to vector<8x128xf32>
    %cst = arith.constant dense<0.000000e+00> : vector<8xf32>
    %6 = vector.multi_reduction <add>, %5, %cst [1] : vector<8x128xf32> to vector<8xf32>
    %7 = vector.shape_cast %6 : vector<8xf32> to vector<8x1xf32>
    %c0_1 = arith.constant 0 : index
    %c0_2 = arith.constant 0 : index
    %c0_3 = arith.constant 0 : index
    %8 = vector.load %arg8[%c0_1, %c0_2, %c0_3] : memref<1x8x1xf32, #tpu.memory_space<vmem>>, vector<1x8x1xf32>
    %9 = vector.shape_cast %8 : vector<1x8x1xf32> to vector<8x1xf32>
    %10 = vector.shape_cast %7 : vector<8x1xf32> to vector<1x8x1xf32>
    tpu.vector_store %arg8[%c0_1, %c0_2, %c0_3], %10 {strides = array<i32>} : memref<1x8x1xf32, #tpu.memory_space<vmem>>, vector<1x8x1xf32>,
    %c0_4 = arith.constant 0 : index
    %c0_5 = arith.constant 0 : index
    %11 = vector.load %arg2[%c0_4, %c0_5] : memref<4x128xf32, #tpu.memory_space<vmem>>, vector<4x128xf32>
    %cst_6 = arith.constant dense<0.000000e+00> : vector<4x8xf32>
    %12 = tpu.matmul %11, %5, %cst_6 {dimension_numbers = #tpu.dot_dimension_numbers<[1], [1], [0], [0], [0, 0, 1, 0], [], []>} : vector<4x128xf32>, vector<8x128xf32>, vector<4x8xf32> -> vector<4x8xf32>
    %c0_7 = arith.constant 0 : index
    %c0_8 = arith.constant 0 : index
    %c0_9 = arith.constant 0 : index
    %13 = vector.load %arg6[%c0_7, %c0_8, %c0_9] : memref<1x4x8xf32, #tpu.memory_space<vmem>>, vector<1x4x8xf32>
    %14 = vector.shape_cast %13 : vector<1x4x8xf32> to vector<4x8xf32>
    %15 = vector.shape_cast %12 : vector<4x8xf32> to vector<1x4x8xf32>
    tpu.vector_store %arg6[%c0_7, %c0_8, %c0_9], %15 {strides = array<i32>} : memref<1x4x8xf32, #tpu.memory_space<vmem>>, vector<1x4x8xf32>,
    %16 = tpu.iota {dimensions = array<i32: 0>} : vector<8x128xi32>
    %c0_10 = arith.constant 0 : index
    %c0_11 = arith.constant 0 : index
    %17 = vector.load %arg3[%c0_10, %c0_11] : memref<1x128xi32, #tpu.memory_space<vmem>>, vector<1x128xi32>
    %18 = vector.broadcast %17 : vector<1x128xi32> to vector<8x128xi32>
    %19 = arith.cmpi eq, %18, %16 : vector<8x128xi32>
    %20 = arith.extui %19 : vector<8x128xi1> to vector<8x128xi32>
    %21 = arith.sitofp %20 : vector<8x128xi32> to vector<8x128xf32>
    %c0_12 = arith.constant 0 : index
    %c0_13 = arith.constant 0 : index
    %22 = vector.load %arg4[%c0_12, %c0_13] : memref<1x128xf32, #tpu.memory_space<vmem>>, vector<1x128xf32>
    %23 = vector.broadcast %22 : vector<1x128xf32> to vector<8x128xf32>
    %24 = arith.mulf %21, %23 : vector<8x128xf32>
    %c0_14 = arith.constant 0 : index
    %c0_15 = arith.constant 0 : index
    %25 = vector.load %arg5[%c0_14, %c0_15] : memref<3x128xf32, #tpu.memory_space<vmem>>, vector<3x128xf32>
    %cst_16 = arith.constant dense<0.000000e+00> : vector<3x8xf32>
    %26 = tpu.matmul %25, %24, %cst_16 {dimension_numbers = #tpu.dot_dimension_numbers<[1], [1], [0], [0], [0, 0, 1, 0], [], []>} : vector<3x128xf32>, vector<8x128xf32>, vector<3x8xf32> -> vector<3x8xf32>
    %c0_17 = arith.constant 0 : index
    %c0_18 = arith.constant 0 : index
    %c0_19 = arith.constant 0 : index
    %27 = vector.load %arg7[%c0_17, %c0_18, %c0_19] : memref<1x3x8xf32, #tpu.memory_space<vmem>>, vector<1x3x8xf32>
    %28 = vector.shape_cast %27 : vector<1x3x8xf32> to vector<3x8xf32>
    %29 = vector.shape_cast %26 : vector<3x8xf32> to vector<1x3x8xf32>
    tpu.vector_store %arg7[%c0_17, %c0_18, %c0_19], %29 {strides = array<i32>} : memref<1x3x8xf32, #tpu.memory_space<vmem>>, vector<1x3x8xf32>,
    return
  }
  func.func @transform_0(%arg0: i32) -> (i32, i32) {
    %c0_i32 = arith.constant 0 : i32
    %c0_i32_0 = arith.constant 0 : i32
    return %c0_i32, %arg0 : i32, i32
  }
  func.func @transform_1(%arg0: i32) -> (i32, i32) {
    %c0_i32 = arith.constant 0 : i32
    %c0_i32_0 = arith.constant 0 : i32
    return %c0_i32, %arg0 : i32, i32
  }
  func.func @transform_2(%arg0: i32) -> (i32, i32) {
    %c0_i32 = arith.constant 0 : i32
    %c0_i32_0 = arith.constant 0 : i32
    return %c0_i32, %arg0 : i32, i32
  }
  func.func @transform_3(%arg0: i32) -> (i32, i32) {
    %c0_i32 = arith.constant 0 : i32
    %c0_i32_0 = arith.constant 0 : i32
    return %c0_i32, %arg0 : i32, i32
  }
  func.func @transform_4(%arg0: i32) -> (i32, i32) {
    %c0_i32 = arith.constant 0 : i32
    %c0_i32_0 = arith.constant 0 : i32
    return %c0_i32, %arg0 : i32, i32
  }
  func.func @transform_5(%arg0: i32) -> (i32, i32, i32) {
    %c0_i32 = arith.constant 0 : i32
    %c0_i32_0 = arith.constant 0 : i32
    %c0_i32_1 = arith.constant 0 : i32
    return %arg0, %c0_i32, %c0_i32_0 : i32, i32, i32
  }
  func.func @transform_6(%arg0: i32) -> (i32, i32, i32) {
    %c0_i32 = arith.constant 0 : i32
    %c0_i32_0 = arith.constant 0 : i32
    %c0_i32_1 = arith.constant 0 : i32
    return %arg0, %c0_i32, %c0_i32_0 : i32, i32, i32
  }
  func.func @transform_7(%arg0: i32) -> (i32, i32, i32) {
    %c0_i32 = arith.constant 0 : i32
    %c0_i32_0 = arith.constant 0 : i32
    %c0_i32_1 = arith.constant 0 : i32
    return %arg0, %c0_i32, %c0_i32_0 : i32, i32, i32
  }
}

</mosaic_0001>

<llo_original>
// kernel: tpu_custom_call.1
$region0: #{tpu_custom_call.1}
  #allocation0 [shape = 'u32[]', space=smem, size = 0x4, offset = 0x4, fixed_abs, tag = 'smem constant byte address 0x4 - core index']
  #allocation1 [shape = 'u32[144,128]{1,0:T(1,128)}', space=vmem, size = 0x12000, scoped, tag = 'internal scratch']
  %s0 = inlined_call_operand.hbm [shape: s32[1,128], index: 0, kind: input, shape index: {}]
  %s1 = inlined_call_operand.hbm [shape: f32[4,128], index: 1, kind: input, shape index: {}]
  %s2 = inlined_call_operand.vmem [shape: s32[1,128], index: 2, kind: input, shape index: {}]
  %s3 = inlined_call_operand.vmem [shape: f32[1,128], index: 3, kind: input, shape index: {}]
  %s4 = inlined_call_operand.vmem [shape: f32[3,128], index: 4, kind: input, shape index: {}]
  %s5 = inlined_call_operand.hbm [shape: f32[1,4,8], index: 5, kind: output, shape index: {0}]
  %s6 = inlined_call_operand.vmem [shape: f32[1,3,8], index: 6, kind: output, shape index: {1}]
  %s7 = inlined_call_operand.vmem [shape: f32[1,8,1], index: 7, kind: output, shape index: {2}]
  %8 = xla_tuple %s5, %s6, %s7
  %s9 = sld [smem:[#allocation0]]
  $region54: #{tpu_custom_call.1} parent=0
    _
  %s11 = ssub.s32 1, %s9
  %s12 = scalar_select 0, %s11, %s9
  $region1: #{tpu_custom_call.1} parent=0
    #allocation2 [shape = 'u8[512]{0}', space=vmem, size = 0x400, scoped, tag = 'input window, operand 0, single buffered']
    #allocation3 [shape = 's32[1]{0}', space=sflag, size = 0x4, scoped, tag = 'scoped memory for tpu_custom_call.1']
    #allocation4 [shape = 's32[1]{0}', space=sflag, size = 0x4, scoped, tag = 'scoped memory for tpu_custom_call.1']
    #allocation5 [shape = 'u8[2048]{0}', space=vmem, size = 0x800, scoped, tag = 'input window, operand 1, single buffered']
    #allocation6 [shape = 's32[1]{0}', space=sflag, size = 0x4, scoped, tag = 'scoped memory for tpu_custom_call.1']
    #allocation7 [shape = 'u8[2048]{0}', space=vmem, size = 0x800, scoped, tag = 'output window, operand 0, single buffered']
    %13 = vsyncpa [#allocation3], 0
    %14 = vsyncpa [#allocation6], 0
    %15 = vsyncpa [#allocation4], 0
    // Predicated region
    $region2: #{tpu_custom_call.1} parent=1 // pred_check
      _
    $region3: #{tpu_custom_call.1} parent=1 // pred_check_branch
      %17 = sbr.rel (0) target = $region5
    $region4: #{tpu_custom_call.1} parent=1 // pred_region
      %s19 = ssub.s32 16, 16
      %20 = vsyncadd [#allocation3], %s19
      %s22 = sshll.u32 [#allocation2], 4
      %s23 = int_to_ptr.vmem [resolvable:$true] %s22
      %25 = dma.hbm_to_vmem [thread:$0]  %s0, 16, %s23, [#allocation3]
    $region5: #{tpu_custom_call.1} parent=1 // pred_fallthru
      _
    // Predicated region
    $region6: #{tpu_custom_call.1} parent=1 // pred_check
      _
    $region7: #{tpu_custom_call.1} parent=1 // pred_check_branch
      %27 = sbr.rel (0) target = $region9
    $region8: #{tpu_custom_call.1} parent=1 // pred_region
      %s29 = ssub.s32 64, 64
      %30 = vsyncadd [#allocation6], %s29
      %s32 = sshll.u32 [#allocation5], 4
      %s33 = int_to_ptr.vmem [resolvable:$true] %s32
      %35 = dma.hbm_to_vmem [thread:$0]  %s1, 64, %s33, [#allocation6]
    $region9: #{tpu_custom_call.1} parent=1 // pred_fallthru
      _
    // Predicated region
    $region10: #{tpu_custom_call.1} parent=1 // pred_check
      _
    $region11: #{tpu_custom_call.1} parent=1 // pred_check_branch
      %37 = sbr.rel (0) target = $region13
    $region12: #{tpu_custom_call.1} parent=1 // pred_region
      _
    $region13: #{tpu_custom_call.1} parent=1 // pred_fallthru
      _
    // Predicated region
    $region14: #{tpu_custom_call.1} parent=1 // pred_check
      _
    $region15: #{tpu_custom_call.1} parent=1 // pred_check_branch
      %39 = sbr.rel (0) target = $region17
    $region16: #{tpu_custom_call.1} parent=1 // pred_region
      _
    $region17: #{tpu_custom_call.1} parent=1 // pred_fallthru
      _
    // Predicated region
    $region18: #{tpu_custom_call.1} parent=1 // pred_check
      _
    $region19: #{tpu_custom_call.1} parent=1 // pred_check_branch
      %41 = sbr.rel (0) target = $region21
    $region20: #{tpu_custom_call.1} parent=1 // pred_region
      _
    $region21: #{tpu_custom_call.1} parent=1 // pred_fallthru
      _
    // Predicated region
    $region22: #{tpu_custom_call.1} parent=1 // pred_check
      _
    $region23: #{tpu_custom_call.1} parent=1 // pred_check_branch
      %43 = sbr.rel (0) target = $region25
    $region24: #{tpu_custom_call.1} parent=1 // pred_region
      %44 = dma.done [#allocation3], 16
    $region25: #{tpu_custom_call.1} parent=1 // pred_fallthru
      _
    // Predicated region
    $region26: #{tpu_custom_call.1} parent=1 // pred_check
      _
    $region27: #{tpu_custom_call.1} parent=1 // pred_check_branch
      %46 = sbr.rel (0) target = $region29
    $region28: #{tpu_custom_call.1} parent=1 // pred_region
      %47 = dma.done [#allocation6], 64
    $region29: #{tpu_custom_call.1} parent=1 // pred_fallthru
      _
    %v48 = vlaneseq
    %v49 = vshrl.u32 %v48, 7
    %v50 = vld [vmem:[#allocation2] sm:$0x1]
    %v51 = vlaneseq
    %v52 = vshrl.u32 %v51, 7
    %v53 = vsub.s32 0, %v52
    %v54 = vrot.slane %v50, %v53
    %vm55 = vcmp.eq.s32.totalorder %v54, %v49
    %v56 = vsel %vm55, 1, 0
    %v57 = vcvt.s32.f32 %v56
    %58 = vadd.xlane.f32.xlu0 %v57
    %v59 = vpop.xlane.xlu0 %58
    %vm60 = vcmask 7168
    %61 = vst.msk [vmem:[%s7] sm:$0xff] %vm60, %v59
    %v62 = vld [vmem:[#allocation5] sm:$0xf]
    %63 = vmatprep.subr.mxu0 0.0
    %64 = vmatpush1.xpose.msra.mxu0 %v57
    %65 = vmatprep.subr.mxu0 0.0
    %66 = vmatpush1.xpose.msra.mxu0 0.0
    %67 = vmatprep.subr.mxu0 0.0
    %68 = vmatpush1.xpose.msra.mxu0 0.0
    %69 = vmatprep.subr.mxu0 0.0
    %70 = vmatpush1.xpose.msra.mxu0 0.0
    %71 = vmatprep.subr.mxu0 0.0
    %72 = vmatpush1.xpose.msra.mxu0 0.0
    %73 = vmatprep.subr.mxu0 0.0
    %74 = vmatpush1.xpose.msra.mxu0 0.0
    %75 = vmatprep.subr.mxu0 0.0
    %76 = vmatpush1.xpose.msra.mxu0 0.0
    %77 = vmatprep.subr.mxu0 0.0
    %78 = vmatpush1.xpose.msra.mxu0 0.0
    %79 = vmatprep.subr.mxu0 0.0
    %80 = vmatpush1.xpose.msra.mxu0 0.0
    %81 = vmatprep.subr.mxu0 0.0
    %82 = vmatpush1.xpose.msra.mxu0 0.0
    %83 = vmatprep.subr.mxu0 0.0
    %84 = vmatpush1.xpose.msra.mxu0 0.0
    %85 = vmatprep.subr.mxu0 0.0
    %86 = vmatpush1.xpose.msra.mxu0 0.0
    %87 = vmatprep.subr.mxu0 0.0
    %88 = vmatpush1.xpose.msra.mxu0 0.0
    %89 = vmatprep.subr.mxu0 0.0
    %90 = vmatpush1.xpose.msra.mxu0 0.0
    %91 = vmatprep.subr.mxu0 0.0
    %92 = vmatpush1.xpose.msra.mxu0 0.0
    %93 = vmatprep.subr.mxu0 0.0
    %94 = vmatpush1.xpose.msra.mxu0 0.0
    %95 = vmatprep.subr.mxu0 0.0
    %96 = vmatpush1.xpose.msra.mxu0 0.0
    %97 = vmatprep.subr.mxu0 0.0
    %98 = vmatpush1.xpose.msra.mxu0 0.0
    %99 = vmatprep.subr.mxu0 0.0
    %100 = vmatpush1.xpose.msra.mxu0 0.0
    %101 = vmatprep.subr.mxu0 0.0
    %102 = vmatpush1.xpose.msra.mxu0 0.0
    %103 = vmatprep.subr.mxu0 0.0
    %104 = vmatpush1.xpose.msra.mxu0 0.0
    %105 = vmatprep.subr.mxu0 0.0
    %106 = vmatpush1.xpose.msra.mxu0 0.0
    %107 = vmatprep.subr.mxu0 0.0
    %108 = vmatpush1.xpose.msra.mxu0 0.0
    %109 = vmatprep.subr.mxu0 0.0
    %110 = vmatpush1.xpose.msra.mxu0 0.0
    %111 = vmatprep.subr.mxu0 0.0
    %112 = vmatpush1.xpose.msra.mxu0 0.0
    %113 = vmatprep.subr.mxu0 0.0
    %114 = vmatpush1.xpose.msra.mxu0 0.0
    %115 = vmatprep.subr.mxu0 0.0
    %116 = vmatpush1.xpose.msra.mxu0 0.0
    %117 = vmatprep.subr.mxu0 0.0
    %118 = vmatpush1.xpose.msra.mxu0 0.0
    %119 = vmatprep.subr.mxu0 0.0
    %120 = vmatpush1.xpose.msra.mxu0 0.0
    %121 = vmatprep.subr.mxu0 0.0
    %122 = vmatpush1.xpose.msra.mxu0 0.0
    %123 = vmatprep.subr.mxu0 0.0
    %124 = vmatpush1.xpose.msra.mxu0 0.0
    %125 = vmatprep.subr.mxu0 0.0
    %126 = vmatpush1.xpose.msra.mxu0 0.0
    %127 = vmatprep.mubr.f32.mxu0 0.0
    %128 = vmatmul.mubr.f32.gmra.mrb[0].mxu0 %v62
    %v129 = vpop.f32.mrb[0].mxu0
    %v130 = vadd.f32 0.0, %v129
    %v131 = vpop.f32.mrb[0].mxu0
    %132 = vdwg.mxu0
    %vm133 = vcmask 60416
    %134 = vst.msk [vmem:[#allocation7] sm:$0xf] %vm133, %v130
    %v135 = vld [vmem:[%s2] sm:$0x1]
    %v136 = vlaneseq
    %v137 = vshrl.u32 %v136, 7
    %v138 = vsub.s32 0, %v137
    %v139 = vrot.slane %v135, %v138
    %vm140 = vcmp.eq.s32.totalorder %v139, %v49
    %v141 = vsel %vm140, 1, 0
    %v142 = vcvt.s32.f32 %v141
    %v143 = vld [vmem:[%s3] sm:$0x1]
    %v145 = vlaneseq
    %v146 = vshrl.u32 %v145, 7
    %v147 = vsub.s32 0, %v146
    %v148 = vrot.slane %v143, %v147
    %v150 = vmul.f32 %v142, %v148
    %v151 = vld [vmem:[%s4] sm:$0x7]
    %152 = vmatprep.subr.mxu0 0.0
    %153 = vmatpush1.xpose.msra.mxu0 %v150
    %154 = vmatprep.subr.mxu0 0.0
    %155 = vmatpush1.xpose.msra.mxu0 0.0
    %156 = vmatprep.subr.mxu0 0.0
    %157 = vmatpush1.xpose.msra.mxu0 0.0
    %158 = vmatprep.subr.mxu0 0.0
    %159 = vmatpush1.xpose.msra.mxu0 0.0
    %160 = vmatprep.subr.mxu0 0.0
    %161 = vmatpush1.xpose.msra.mxu0 0.0
    %162 = vmatprep.subr.mxu0 0.0
    %163 = vmatpush1.xpose.msra.mxu0 0.0
    %164 = vmatprep.subr.mxu0 0.0
    %165 = vmatpush1.xpose.msra.mxu0 0.0
    %166 = vmatprep.subr.mxu0 0.0
    %167 = vmatpush1.xpose.msra.mxu0 0.0
    %168 = vmatprep.subr.mxu0 0.0
    %169 = vmatpush1.xpose.msra.mxu0 0.0
    %170 = vmatprep.subr.mxu0 0.0
    %171 = vmatpush1.xpose.msra.mxu0 0.0
    %172 = vmatprep.subr.mxu0 0.0
    %173 = vmatpush1.xpose.msra.mxu0 0.0
    %174 = vmatprep.subr.mxu0 0.0
    %175 = vmatpush1.xpose.msra.mxu0 0.0
    %176 = vmatprep.subr.mxu0 0.0
    %177 = vmatpush1.xpose.msra.mxu0 0.0
    %178 = vmatprep.subr.mxu0 0.0
    %179 = vmatpush1.xpose.msra.mxu0 0.0
    %180 = vmatprep.subr.mxu0 0.0
    %181 = vmatpush1.xpose.msra.mxu0 0.0
    %182 = vmatprep.subr.mxu0 0.0
    %183 = vmatpush1.xpose.msra.mxu0 0.0
    %184 = vmatprep.subr.mxu0 0.0
    %185 = vmatpush1.xpose.msra.mxu0 0.0
    %186 = vmatprep.subr.mxu0 0.0
    %187 = vmatpush1.xpose.msra.mxu0 0.0
    %188 = vmatprep.subr.mxu0 0.0
    %189 = vmatpush1.xpose.msra.mxu0 0.0
    %190 = vmatprep.subr.mxu0 0.0
    %191 = vmatpush1.xpose.msra.mxu0 0.0
    %192 = vmatprep.subr.mxu0 0.0
    %193 = vmatpush1.xpose.msra.mxu0 0.0
    %194 = vmatprep.subr.mxu0 0.0
    %195 = vmatpush1.xpose.msra.mxu0 0.0
    %196 = vmatprep.subr.mxu0 0.0
    %197 = vmatpush1.xpose.msra.mxu0 0.0
    %198 = vmatprep.subr.mxu0 0.0
    %199 = vmatpush1.xpose.msra.mxu0 0.0
    %200 = vmatprep.subr.mxu0 0.0
    %201 = vmatpush1.xpose.msra.mxu0 0.0
    %202 = vmatprep.subr.mxu0 0.0
    %203 = vmatpush1.xpose.msra.mxu0 0.0
    %204 = vmatprep.subr.mxu0 0.0
    %205 = vmatpush1.xpose.msra.mxu0 0.0
    %206 = vmatprep.subr.mxu0 0.0
    %207 = vmatpush1.xpose.msra.mxu0 0.0
    %208 = vmatprep.subr.mxu0 0.0
    %209 = vmatpush1.xpose.msra.mxu0 0.0
    %210 = vmatprep.subr.mxu0 0.0
    %211 = vmatpush1.xpose.msra.mxu0 0.0
    %212 = vmatprep.subr.mxu0 0.0
    %213 = vmatpush1.xpose.msra.mxu0 0.0
    %214 = vmatprep.subr.mxu0 0.0
    %215 = vmatpush1.xpose.msra.mxu0 0.0
    %216 = vmatprep.mubr.f32.mxu0 0.0
    %217 = vmatmul.mubr.f32.gmra.mrb[0].mxu0 %v151
    %v218 = vpop.f32.mrb[0].mxu0
    %v219 = vadd.f32 0.0, %v218
    %v220 = vpop.f32.mrb[0].mxu0
    %221 = vdwg.mxu0
    %vm222 = vcmask 59392
    %223 = vst.msk [vmem:[%s6] sm:$0x7] %vm222, %v219
    // Predicated region
    $region30: #{tpu_custom_call.1} parent=1 // pred_check
      _
    $region31: #{tpu_custom_call.1} parent=1 // pred_check_branch
      %225 = sbr.rel (0) target = $region33
    $region32: #{tpu_custom_call.1} parent=1 // pred_region
      %s227 = ssub.s32 64, 64
      %228 = vsyncadd [#allocation4], %s227
      %s230 = sshll.u32 [#allocation7], 4
      %s231 = int_to_ptr.vmem [resolvable:$true] %s230
      %233 = dma.vmem_to_hbm [thread:$0]  %s231, 64, %s5, [#allocation4]
    $region33: #{tpu_custom_call.1} parent=1 // pred_fallthru
      _
    // Predicated region
    $region34: #{tpu_custom_call.1} parent=1 // pred_check
      _
    $region35: #{tpu_custom_call.1} parent=1 // pred_check_branch
      %235 = sbr.rel (0) target = $region37
    $region36: #{tpu_custom_call.1} parent=1 // pred_region
      _
    $region37: #{tpu_custom_call.1} parent=1 // pred_fallthru
      _
    // Predicated region
    $region38: #{tpu_custom_call.1} parent=1 // pred_check
      _
    $region39: #{tpu_custom_call.1} parent=1 // pred_check_branch
      %237 = sbr.rel (0) target = $region41
    $region40: #{tpu_custom_call.1} parent=1 // pred_region
      _
    $region41: #{tpu_custom_call.1} parent=1 // pred_fallthru
      _
    // Predicated region
    $region42: #{tpu_custom_call.1} parent=1 // pred_check
      _
    $region43: #{tpu_custom_call.1} parent=1 // pred_check_branch
      %239 = sbr.rel (0) target = $region45
    $region44: #{tpu_custom_call.1} parent=1 // pred_region
      %240 = dma.done [#allocation4], 64
    $region45: #{tpu_custom_call.1} parent=1 // pred_fallthru
      _
    // Predicated region
    $region46: #{tpu_custom_call.1} parent=1 // pred_check
      _
    $region47: #{tpu_custom_call.1} parent=1 // pred_check_branch
      %242 = sbr.rel (0) target = $region49
    $region48: #{tpu_custom_call.1} parent=1 // pred_region
      _
    $region49: #{tpu_custom_call.1} parent=1 // pred_fallthru
      _
    // Predicated region
    $region50: #{tpu_custom_call.1} parent=1 // pred_check
      _
    $region51: #{tpu_custom_call.1} parent=1 // pred_check_branch
      %244 = sbr.rel (0) target = $region53
    $region52: #{tpu_custom_call.1} parent=1 // pred_region
      _
    $region53: #{tpu_custom_call.1} parent=1 // pred_fallthru
      _
    %245 = vsyncpa [#allocation3], 1
    %246 = vsyncpa [#allocation6], 1
    %247 = vsyncpa [#allocation4], 1

</llo_original>
